<compile_context>
chip_gen: v7x
topology: tpu7x:2x2x1
jax: 0.10.0
libtpu: 0.0.40
codegen_flags: <defaults>
</compile_context>

<pallas_src>
import numpy as np
import jax
import jax.numpy as jnp
from jax.experimental import pallas as pl
from jax.experimental.pallas import tpu as pltpu

ORDERS = ['back', 'down', 'front', 'left', 'right', 'top']
SIDES = ['up', 'down', 'left', 'right']
RELATION = {
    'back':  ['top-up_yes_yes_no', 'down-down_yes_yes_no', 'right-right_no_no_no', 'left-left_no_no_no'],
    'down':  ['front-down_no_no_no', 'back-down_yes_yes_no', 'left-down_yes_no_yes', 'right-down_no_yes_yes'],
    'front': ['top-down_no_no_no', 'down-up_no_no_no', 'left-right_no_no_no', 'right-left_no_no_no'],
    'left':  ['top-left_yes_no_yes', 'down-left_no_yes_yes', 'back-right_no_no_no', 'front-left_no_no_no'],
    'right': ['top-right_no_yes_yes', 'down-right_yes_no_yes', 'front-right_no_no_no', 'back-left_no_no_no'],
    'top':   ['back-up_yes_yes_no', 'front-up_no_no_no', 'left-up_no_yes_yes', 'right-up_yes_no_yes'],
}

_R_VECS = np.array([[0, -180.0, 0], [90.0, 0, 0], [0, 0, 0],
                    [0, 90, 0], [0, -90, 0], [-90, 0, 0]], np.float32) / 180.0 * np.pi


def _rodrigues(rvec):
    """cv2.Rodrigues replacement (rotation vector -> rotation matrix)."""
    rvec = np.asarray(rvec, np.float64)
    theta = np.linalg.norm(rvec)
    if theta < 1e-12:
        return np.eye(3, dtype=np.float32)
    k = rvec / theta
    Kx = np.array([[0, -k[2], k[1]], [k[2], 0, -k[0]], [-k[1], k[0], 0]], np.float64)
    R = np.cos(theta) * np.eye(3) + np.sin(theta) * Kx + (1.0 - np.cos(theta)) * np.outer(k, k)
    return R.astype(np.float32)


_R_LST = [_rodrigues(r) for r in _R_VECS]


def _cube_grid(cube_dim, fov_deg):
    """Normalized camera rays of a cube face (the 'front' grid, R = I)."""
    fov = fov_deg / 180.0 * np.pi
    f = 0.5 * cube_dim / np.tan(0.5 * fov)
    cx = (cube_dim - 1) / 2.0
    cy = cx
    D = cube_dim
    xs = np.tile(np.arange(D)[None, :, None], [D, 1, 1])
    ys = np.tile(np.arange(D)[:, None, None], [1, D, 1])
    ones = np.ones_like(xs)
    xyz = np.concatenate([xs, ys, ones], axis=-1).astype(np.float64)
    Kmat = np.array([[f, 0, cx], [0, f, cy], [0, 0, 1]], np.float64)
    xyz = xyz @ np.linalg.inv(Kmat).T
    xyz = xyz / np.linalg.norm(xyz, axis=-1, keepdims=True)
    return xyz, {'f': float(f), 'cx': float(cx), 'cy': float(cy)}


def _get_loc(h, pad):
    """Host-side precompute: per (face, side) grid_sample coords + validity mask."""
    D = h + 2 * pad
    theta = 2.0 * np.arctan((0.5 * h + pad) / (0.5 * h))
    grid_front, _ = _cube_grid(D, theta / np.pi * 180.0)   # big grid, front face (R = I)
    _, K = _cube_grid(h, 90.0)                             # intrinsics of original grid
    f, cx, cy = K['f'], K['cx'], K['cy']
    Kmat = np.array([[f, 0, cx], [0, f, cy], [0, 0, 1]], np.float64)

    data = {}
    for i, face in enumerate(ORDERS):
        data[face] = {}
        for j, side in enumerate(SIDES):
            cname = RELATION[face][j].split('-')[0]
            cidx = ORDERS.index(cname)
            R_i2c = _R_LST[cidx].astype(np.float64) @ _R_LST[i].astype(np.float64).T
            new_grid = grid_front @ R_i2c.T
            proj = new_grid @ Kmat.T
            with np.errstate(divide='ignore', invalid='ignore'):
                x = proj[..., 0] / proj[..., 2]
                y = proj[..., 1] / proj[..., 2]
            x = (x - cx) / cx
            y = (y - cy) / cy
            mask = (x >= -1.01) & (x <= 1.01) & (y >= -1.01) & (y <= 1.01)
            # non-finite values only occur where mask is False (never used)
            x = np.nan_to_num(x, nan=0.0, posinf=1.0, neginf=-1.0)
            y = np.nan_to_num(y, nan=0.0, posinf=1.0, neginf=-1.0)
            x = np.clip(x, -1.0, 1.0)
            y = np.clip(y, -1.0, 1.0)
            if side == 'up':
                sl = (slice(0, pad), slice(None))
            elif side == 'down':
                sl = (slice(D - pad, D), slice(None))
            elif side == 'left':
                sl = (slice(None), slice(0, pad))
            else:  # right
                sl = (slice(None), slice(D - pad, D))
            data[face][side] = {
                'cidx': cidx,
                'mask': mask[sl],
                'x': x[sl].astype(np.float32),
                'y': y[sl].astype(np.float32),
                'rows': np.arange(D)[sl[0]],
                'cols': np.arange(D)[sl[1]],
            }
    return data


def build_border_matrices(h, w, pad, data):
    """Border-only sampling matrices.

    Returns:
      A        : (6*4, h*w, Bp) f32 — per (face, neighbour-slot) map from the
                 connected face's pixels to the face's border pixels.
      face_tbl : (6*4,) int32 — connected source face index per (face, slot).
      B, Bp    : true border pixel count and its 128-padded value.
      layout   : (pad, D) so the wrapper knows how the border columns are laid
                 out (up strip, down strip, left strip, right strip).
    """
    D = h + 2 * pad
    # Border column ordering: up strip (pad x D), down strip (pad x D),
    # left strip (h x pad), right strip (h x pad). Corners belong to up/down.
    coords_r, coords_c = [], []
    for r in range(pad):
        for cc in range(D):
            coords_r.append(r); coords_c.append(cc)
    for r in range(D - pad, D):
        for cc in range(D):
            coords_r.append(r); coords_c.append(cc)
    for r in range(pad, D - pad):
        for cc in range(pad):
            coords_r.append(r); coords_c.append(cc)
    for r in range(pad, D - pad):
        for cc in range(D - pad, D):
            coords_r.append(r); coords_c.append(cc)
    coords_r = np.asarray(coords_r)
    coords_c = np.asarray(coords_c)
    B = coords_r.size                               # = D*D - h*w
    Bp = ((B + 127) // 128) * 128                   # lane-dense output width
    border_map = -np.ones((D, D), np.int64)
    border_map[coords_r, coords_c] = np.arange(B)

    A = np.zeros((6, 4, h * w, Bp), np.float32)
    face_tbl = np.zeros((6, 4), np.int32)
    for i, face in enumerate(ORDERS):
        owner = -np.ones(Bp, np.int64)              # which side finally owns each column
        for j, side in enumerate(SIDES):
            d = data[face][side]
            face_tbl[i, j] = d['cidx']
            sel = np.nonzero(d['mask'])
            if sel[0].size == 0:
                continue
            x = d['x'][sel]
            y = d['y'][sel]
            ro = d['rows'][sel[0]]
            co = d['cols'][sel[1]]
            q = border_map[ro, co]
            owner[q] = j                            # later sides overwrite earlier ones
            ix = (x + 1.0) * 0.5 * (w - 1)
            iy = (y + 1.0) * 0.5 * (h - 1)
            x0 = np.floor(ix).astype(np.int64)
            y0 = np.floor(iy).astype(np.int64)
            x1 = x0 + 1
            y1 = y0 + 1
            wx1 = ix - x0
            wx0 = 1.0 - wx1
            wy1 = iy - y0
            wy0 = 1.0 - wy1
            for ys, xs, wgt in ((y0, x0, wy0 * wx0), (y0, x1, wy0 * wx1),
                                (y1, x0, wy1 * wx0), (y1, x1, wy1 * wx1)):
                valid = (xs >= 0) & (xs <= w - 1) & (ys >= 0) & (ys <= h - 1)
                wgt = np.where(valid, wgt, 0.0).astype(np.float32)
                xs_c = np.clip(xs, 0, w - 1)
                ys_c = np.clip(ys, 0, h - 1)
                np.add.at(A[i, j], (ys_c * w + xs_c, q), wgt)
        # Keep only the weights of the final owning side per border column.
        for j in range(4):
            A[i, j][:, owner != j] = 0.0
    return A.reshape(6 * 4, h * w, Bp), face_tbl.reshape(-1), B, Bp


# ----------------------------- Pallas kernel ------------------------------- #

def _sphere_pad_border_kernel(tbl_ref, x_ref, a_ref, o_ref, acc_ref):
    # tbl_ref: SMEM (24,) int32 scalar-prefetch face table (used in index_maps)
    # x_ref  : (1, M, h*w)  bf16 — the connected source face for this (face, slot)
    # a_ref  : (1, h*w, Bp) bf16 — border sampling weights for this (face, slot)
    # o_ref  : (1, M, Bp)   out dtype — border slab of the current face
    # acc_ref: (M, Bp)      f32 VMEM accumulator across the 4 neighbour slots
    j = pl.program_id(1)

    @pl.when(j == 0)
    def _():
        acc_ref[...] = jnp.zeros_like(acc_ref)

    acc_ref[...] += jnp.dot(
        x_ref[0, :, :], a_ref[0, :, :], preferred_element_type=jnp.float32)

    @pl.when(j == pl.num_programs(1) - 1)
    def _():
        o_ref[0, :, :] = acc_ref[...].astype(o_ref.dtype)


def sphere_pad(x, pad, A_bf16, face_tbl, B, Bp):
    bs, c, h, w = x.shape
    assert bs % 6 == 0 and h == w
    R = bs // 6
    D = h + 2 * pad
    hw = h * w
    M = R * c

    # (bs, c, h, w) with interleaved faces -> (6, R*c, h*w); face-major layout.
    xf = x.reshape(R, 6, c, h, w).transpose(1, 0, 2, 3, 4)          # (6, R, c, h, w)
    x2 = xf.reshape(6, M, hw).astype(jnp.bfloat16)

    border = pl.pallas_call(
        _sphere_pad_border_kernel,
        out_shape=jax.ShapeDtypeStruct((6, M, Bp), x.dtype),
        grid_spec=pltpu.PrefetchScalarGridSpec(
            num_scalar_prefetch=1,
            grid=(6, 4),
            in_specs=[
                # connected source face selected through the prefetched table
                pl.BlockSpec((1, M, hw), lambda i, j, tbl: (tbl[i * 4 + j], 0, 0)),
                # border weight matrix for (face i, neighbour slot j)
                pl.BlockSpec((1, hw, Bp), lambda i, j, tbl: (i * 4 + j, 0, 0)),
            ],
            out_specs=pl.BlockSpec((1, M, Bp), lambda i, j, tbl: (i, 0, 0)),
            scratch_shapes=[pltpu.VMEM((M, Bp), jnp.float32)],
        ),
        compiler_params=pltpu.CompilerParams(
            dimension_semantics=("parallel", "arbitrary")),
    )(face_tbl, x2, A_bf16)

    # Reassemble (6, R, c, D, D): exact centre copy + the four border strips.
    border = border[:, :, :B].reshape(6, R, c, B)
    up = border[..., :pad * D].reshape(6, R, c, pad, D)
    down = border[..., pad * D:2 * pad * D].reshape(6, R, c, pad, D)
    left = border[..., 2 * pad * D:2 * pad * D + h * pad].reshape(6, R, c, h, pad)
    right = border[..., 2 * pad * D + h * pad:].reshape(6, R, c, h, pad)
    mid = jnp.concatenate([left, xf, right], axis=-1)               # (6, R, c, h, D)
    full = jnp.concatenate([up, mid, down], axis=-2)                # (6, R, c, D, D)
    # interleave faces back: out[k*6 + i] = face i, repeat k
    out = full.transpose(1, 0, 2, 3, 4).reshape(bs, c, D, D)
    return out


# --------------------- numpy reference (torch semantics) ------------------- #

def _grid_sample_np(inp, gx, gy):
    """F.grid_sample(align_corners=True, mode='bilinear', padding_mode='zeros')."""
    N, C, H, W = inp.shape
    ix = (gx + 1.0) * 0.5 * (W - 1)
    iy = (gy + 1.0) * 0.5 * (H - 1)
    x0 = np.floor(ix).astype(np.int64)
    y0 = np.floor(iy).astype(np.int64)
    x1 = x0 + 1
    y1 = y0 + 1
    wx1 = ix - x0
    wx0 = 1.0 - wx1
    wy1 = iy - y0
    wy0 = 1.0 - wy1

    def corner(ys, xs, wgt):
        valid = (xs >= 0) & (xs <= W - 1) & (ys >= 0) & (ys <= H - 1)
        xs_c = np.clip(xs, 0, W - 1)
        ys_c = np.clip(ys, 0, H - 1)
        vals = inp[:, :, ys_c, xs_c]
        return vals * (wgt * valid)[None, None]

    return (corner(y0, x0, wy0 * wx0) + corner(y0, x1, wy0 * wx1) +
            corner(y1, x0, wy1 * wx0) + corner(y1, x1, wy1 * wx1))


def sphere_pad_reference(x_np, pad, data):
    bs, c, h, w = x_np.shape
    R = bs // 6
    D = h + 2 * pad
    faces_out = []
    for i, face in enumerate(ORDERS):
        this = x_np[i::6]
        padded = np.zeros((R, c, D, D), x_np.dtype)
        padded[:, :, pad:pad + h, pad:pad + w] = this
        for side in SIDES:
            d = data[face][side]
            connected = x_np[d['cidx']::6]
            interp = _grid_sample_np(connected, d['x'], d['y'])
            rows, cols = d['rows'], d['cols']
            region = padded[:, :, rows[0]:rows[-1] + 1, cols[0]:cols[-1] + 1]
            m = np.broadcast_to(d['mask'][None, None], interp.shape)
            np.copyto(region, interp.astype(x_np.dtype), where=m)
        faces_out.append(padded)
    return np.stack(faces_out, axis=1).reshape(bs, c, D, D)


# ---------------------------------- main ----------------------------------- #

if __name__ == "__main__":
    pad = 2
    bs, c, h, w = 12, 4, 16, 16   # bs = 12 -> 2 "repeats" of the 6 cube faces
    key = jax.random.PRNGKey(0)
    x = jax.random.normal(key, (bs, c, h, w), dtype=jnp.float32)

    # host-side precompute (equivalent to the module's cached self.data grids)
    data = _get_loc(h, pad)
    A_np, face_tbl_np, B, Bp = build_border_matrices(h, w, pad, data)
    A = jnp.asarray(A_np, dtype=jnp.bfloat16)          # bf16 weight stream
    face_tbl = jnp.asarray(face_tbl_np, dtype=jnp.int32)

    out = sphere_pad(x, pad, A, face_tbl, B, Bp)
    out = jax.block_until_ready(out)

    ref = sphere_pad_reference(np.asarray(x), pad, data)
    assert out.shape == (bs, c, h + 2 * pad, w + 2 * pad)
    np.testing.assert_allclose(np.asarray(out), ref, atol=2e-2, rtol=2e-2)
    print("KERNEL_OK")
</pallas_src>

<mosaic_0001>
module attributes {stable_mosaic.version = 11 : i64} {
  func.func @_sphere_pad_border_kernel(%arg0: i32, %arg1: i32, %arg2: memref<24xi32, #tpu.memory_space<smem>>, %arg3: memref<1x8x256xbf16, #tpu.memory_space<vmem>>, %arg4: memref<1x256x256xbf16, #tpu.memory_space<vmem>>, %arg5: memref<1x8x256xf32, #tpu.memory_space<vmem>>, %arg6: memref<8x256xf32, #tpu.memory_space<vmem>>) attributes {dimension_semantics = [#tpu.dimension_semantics<parallel>, #tpu.dimension_semantics<arbitrary>], iteration_bounds = array<i64: 6, 4>, scalar_prefetch = 1 : i64, scratch_operands = 1 : i64, tpu.core_type = #tpu.core_type<tc>, window_params = [{transform_indices = @transform_0, window_bounds = array<i64: 1, 8, 256>}, {transform_indices = @transform_1, window_bounds = array<i64: 1, 256, 256>}, {transform_indices = @transform_2, window_bounds = array<i64: 1, 8, 256>}]} {
    %c0_i32 = arith.constant 0 : i32
    %0 = arith.cmpi eq, %arg1, %c0_i32 : i32
    %1 = arith.extui %0 : i1 to i32
    %c0_i32_0 = arith.constant 0 : i32
    %2 = arith.cmpi ne, %1, %c0_i32_0 : i32
    scf.if %2 {
      %cst_11 = arith.constant 0.000000e+00 : f32
      %14 = vector.broadcast %cst_11 : f32 to vector<8x256xf32>
      %c0_12 = arith.constant 0 : index
      %c0_13 = arith.constant 0 : index
      %15 = vector.load %arg6[%c0_12, %c0_13] : memref<8x256xf32, #tpu.memory_space<vmem>>, vector<8x256xf32>
      tpu.vector_store %arg6[%c0_12, %c0_13], %14 {strides = array<i32>} : memref<8x256xf32, #tpu.memory_space<vmem>>, vector<8x256xf32>,
    } else {
    }
    %c0 = arith.constant 0 : index
    %c0_1 = arith.constant 0 : index
    %3 = vector.load %arg6[%c0, %c0_1] : memref<8x256xf32, #tpu.memory_space<vmem>>, vector<8x256xf32>
    %c0_2 = arith.constant 0 : index
    %c0_3 = arith.constant 0 : index
    %c0_4 = arith.constant 0 : index
    %4 = vector.load %arg3[%c0_2, %c0_3, %c0_4] : memref<1x8x256xbf16, #tpu.memory_space<vmem>>, vector<1x8x256xbf16>
    %5 = vector.shape_cast %4 : vector<1x8x256xbf16> to vector<8x256xbf16>
    %c0_5 = arith.constant 0 : index
    %c0_6 = arith.constant 0 : index
    %c0_7 = arith.constant 0 : index
    %6 = vector.load %arg4[%c0_5, %c0_6, %c0_7] : memref<1x256x256xbf16, #tpu.memory_space<vmem>>, vector<1x256x256xbf16>
    %7 = vector.shape_cast %6 : vector<1x256x256xbf16> to vector<256x256xbf16>
    %cst = arith.constant dense<0.000000e+00> : vector<8x256xf32>
    %8 = tpu.matmul %5, %7, %cst {dimension_numbers = #tpu.dot_dimension_numbers<[1], [0], [0], [1], [0, 0, 1, 1], [], []>} : vector<8x256xbf16>, vector<256x256xbf16>, vector<8x256xf32> -> vector<8x256xf32>
    %9 = arith.addf %3, %8 : vector<8x256xf32>
    %c0_8 = arith.constant 0 : index
    %c0_9 = arith.constant 0 : index
    %10 = vector.load %arg6[%c0_8, %c0_9] : memref<8x256xf32, #tpu.memory_space<vmem>>, vector<8x256xf32>
    tpu.vector_store %arg6[%c0_8, %c0_9], %9 {strides = array<i32>} : memref<8x256xf32, #tpu.memory_space<vmem>>, vector<8x256xf32>,
    %c3_i32 = arith.constant 3 : i32
    %11 = arith.cmpi eq, %arg1, %c3_i32 : i32
    %12 = arith.extui %11 : i1 to i32
    %c0_i32_10 = arith.constant 0 : i32
    %13 = arith.cmpi ne, %12, %c0_i32_10 : i32
    scf.if %13 {
      %c0_11 = arith.constant 0 : index
      %c0_12 = arith.constant 0 : index
      %14 = vector.load %arg6[%c0_11, %c0_12] : memref<8x256xf32, #tpu.memory_space<vmem>>, vector<8x256xf32>
      %c0_13 = arith.constant 0 : index
      %c0_14 = arith.constant 0 : index
      %c0_15 = arith.constant 0 : index
      %15 = vector.load %arg5[%c0_13, %c0_14, %c0_15] : memref<1x8x256xf32, #tpu.memory_space<vmem>>, vector<1x8x256xf32>
      %16 = vector.shape_cast %15 : vector<1x8x256xf32> to vector<8x256xf32>
      %17 = vector.shape_cast %14 : vector<8x256xf32> to vector<1x8x256xf32>
      tpu.vector_store %arg5[%c0_13, %c0_14, %c0_15], %17 {strides = array<i32>} : memref<1x8x256xf32, #tpu.memory_space<vmem>>, vector<1x8x256xf32>,
    } else {
    }
    return
  }
  func.func @transform_0(%arg0: i32, %arg1: i32, %arg2: memref<24xi32, #tpu.memory_space<smem>>) -> (i32, i32, i32) {
    %c4_i32 = arith.constant 4 : i32
    %0 = arith.muli %arg0, %c4_i32 : i32
    %1 = arith.addi %0, %arg1 : i32
    %2 = arith.index_cast %1 : i32 to index
    %3 = memref.load %arg2[%2] : memref<24xi32, #tpu.memory_space<smem>>
    %c0_i32 = arith.constant 0 : i32
    %c0_i32_0 = arith.constant 0 : i32
    %c0_i32_1 = arith.constant 0 : i32
    return %3, %c0_i32, %c0_i32_0 : i32, i32, i32
  }
  func.func @transform_1(%arg0: i32, %arg1: i32, %arg2: memref<24xi32, #tpu.memory_space<smem>>) -> (i32, i32, i32) {
    %c4_i32 = arith.constant 4 : i32
    %0 = arith.muli %arg0, %c4_i32 : i32
    %1 = arith.addi %0, %arg1 : i32
    %c0_i32 = arith.constant 0 : i32
    %c0_i32_0 = arith.constant 0 : i32
    %c0_i32_1 = arith.constant 0 : i32
    return %1, %c0_i32, %c0_i32_0 : i32, i32, i32
  }
  func.func @transform_2(%arg0: i32, %arg1: i32, %arg2: memref<24xi32, #tpu.memory_space<smem>>) -> (i32, i32, i32) {
    %c0_i32 = arith.constant 0 : i32
    %c0_i32_0 = arith.constant 0 : i32
    %c0_i32_1 = arith.constant 0 : i32
    return %arg0, %c0_i32, %c0_i32_0 : i32, i32, i32
  }
}

</mosaic_0001>

<llo_original>
// kernel: tpu_custom_call.1
$region0: #{tpu_custom_call.1}
  #allocation0 [shape = 'u32[]', space=smem, size = 0x4, offset = 0x4, fixed_abs, tag = 'smem constant byte address 0x4 - core index']
  #allocation1 [shape = 'u32[144,128]{1,0:T(1,128)}', space=vmem, size = 0x12000, scoped, tag = 'internal scratch']
  #allocation2 [shape = 'f32[8,256]{1,0:T(8,128)}', space=vmem, size = 0x2000, scoped, tag = 'scratch operand']
  #allocation3 [shape = 's32[1]{0}', space=sflag, size = 0x4, scoped, tag = 'scoped memory for tpu_custom_call.1']
  #allocation4 [shape = 'u8[512]{0}', space=smem, size = 0x200, scoped, tag = 'prefetched SMEM operand 0']
  %s0 = inlined_call_operand.hbm [shape: s32[24], index: 0, kind: input, shape index: {}]
  %s1 = inlined_call_operand.hbm [shape: bf16[6,8,256], index: 1, kind: input, shape index: {}]
  %s2 = inlined_call_operand.hbm [shape: bf16[24,256,256], index: 2, kind: input, shape index: {}]
  %s3 = inlined_call_operand.hbm [shape: f32[6,8,256], index: 3, kind: output, shape index: {}]
  %s4 = sld [smem:[#allocation0]]
  $region57: #{tpu_custom_call.1} parent=0
    _
  %s6 = ssub.s32 1, %s4
  %s7 = scalar_select 0, %s6, %s4
  %9 = dma.hbm_to_smem %s0, 16, [#allocation4], [#allocation3]
  %10 = dma.done [#allocation3], 16
  %11 = sfence
  $region1: #{tpu_custom_call.1} parent=0
    #allocation5 [shape = 'u8[8192]{0}', space=vmem, size = 0x2000, scoped, tag = 'input window, operand 1']
    #allocation6 [shape = 's32[2]{0}', space=sflag, size = 0x8, scoped, tag = 'scoped memory for tpu_custom_call.1']
    #allocation7 [shape = 's32[2]{0}', space=sflag, size = 0x8, scoped, tag = 'scoped memory for tpu_custom_call.1']
    #allocation8 [shape = 'u8[262144]{0}', space=vmem, size = 0x40000, scoped, tag = 'input window, operand 2']
    #allocation9 [shape = 's32[2]{0}', space=sflag, size = 0x8, scoped, tag = 'scoped memory for tpu_custom_call.1']
    #allocation10 [shape = 'u8[16384]{0}', space=vmem, size = 0x4000, scoped, tag = 'output window, operand 0']
    %12 = vsyncpa [#allocation6], 0
    %s13 = scalar_lea.sflag [#allocation6], 1
    %14 = vsyncpa %s13, 0
    %15 = vsyncpa [#allocation9], 0
    %s16 = scalar_lea.sflag [#allocation9], 1
    %17 = vsyncpa %s16, 0
    %18 = vsyncpa [#allocation7], 0
    %s19 = scalar_lea.sflag [#allocation7], 1
    %20 = vsyncpa %s19, 0
    loop: start=0, step=1, limit=26
    $region2: #{tpu_custom_call.1} parent=1 // loop_pre_header
      _
    $region3: #{tpu_custom_call.1} parent=1 // loop_header
      %s22 = sphi 0, %s26
      %p23 = scmp.ge.s32.totalorder %s22, 26
      %s29 = sphi 0, %s41
      %s30 = sphi 0, %s37
      %s31 = sphi 0, %s29
      %s32 = sphi 0, %s30
      %s33 = sphi 0, %s31
      %s34 = sphi 0, %s32
      %s50 = sphi 0, %s52
      %s53 = sphi 0, %s50
      %s54 = sphi 0, %s53
      %s70 = sphi 0, %s54
      %s80 = sphi 0, %s82
      %s83 = sphi 0, %s80
      %s84 = sphi 0, %s83
      %s100 = sphi 0, %s84
      %s106 = sphi 0, %s108
      %s109 = sphi 0, %s106
      %s110 = sphi 0, %s109
      %s126 = sphi 0, %s110
    $region4: #{tpu_custom_call.1} parent=1 // loop_header_branch
      %25 = sbr.rel (%p23) target = $region8
    $region5: #{tpu_custom_call.1} parent=1 // loop_body
      %s27 = ssub.s32 %s22, 1
      %s28 = ssub.s32 %s22, 2
      %s35 = sadd.s32 1, %s30
      %p36 = scmp.ge.s32.totalorder %s35, 4
      %s37 = scalar_select %p36, 0, %s35
      %s38 = sadd.s32 1, %s29
      %s39 = scalar_select %p36, %s38, %s29
      %p40 = scmp.ge.s32.totalorder %s39, 6
      %s41 = scalar_select %p40, 0, %s39
      %s42 = smul.u32 %s29, 4
      %s43 = sadd.s32 %s42, %s30
      %s44 = sld [smem:[#allocation4 + %s43]]
      %s45 = smul.u32 %s41, 4
      %s46 = sadd.s32 %s45, %s37
      %s47 = sld [smem:[#allocation4 + %s46]]
      %s48 = ssub.s32 %s44, %s47
      %p49 = scmp.eq.s32.totalorder %s48, 0
      %s51 = sadd.s32 %s50, 1
      %s52 = scalar_select %p49, %s50, %s51
      %p55 = pneg %p49
      %p56 = scmp.eq.s32.totalorder %s22, 23
      %p57 = por %p55, %p56
      %p58 = scmp.ne.s32.totalorder %s50, %s53
      %p59 = scmp.eq.s32.totalorder %s22, 0
      %p60 = por %p58, %p59
      %p61 = scmp.ne.s32.totalorder %s50, %s53
      %p62 = scmp.eq.s32.totalorder %s27, 23
      %p63 = por %p61, %p62
      %p64 = scmp.ne.s32.totalorder %s53, %s54
      %p65 = scmp.eq.s32.totalorder %s27, 0
      %p66 = por %p64, %p65
      %p67 = scmp.ne.s32.totalorder %s53, %s54
      %p68 = scmp.eq.s32.totalorder %s28, 23
      %p69 = por %p67, %p68
      %p71 = scmp.ne.s32.totalorder %s54, %s70
      %p72 = scmp.eq.s32.totalorder %s28, 0
      %p73 = por %p71, %p72
      %s74 = smul.u32 %s29, 4
      %s75 = sadd.s32 %s74, %s30
      %s76 = smul.u32 %s41, 4
      %s77 = sadd.s32 %s76, %s37
      %s78 = ssub.s32 %s75, %s77
      %p79 = scmp.eq.s32.totalorder %s78, 0
      %s81 = sadd.s32 %s80, 1
      %s82 = scalar_select %p79, %s80, %s81
      %p85 = pneg %p79
      %p86 = scmp.eq.s32.totalorder %s22, 23
      %p87 = por %p85, %p86
      %p88 = scmp.ne.s32.totalorder %s80, %s83
      %p89 = scmp.eq.s32.totalorder %s22, 0
      %p90 = por %p88, %p89
      %p91 = scmp.ne.s32.totalorder %s80, %s83
      %p92 = scmp.eq.s32.totalorder %s27, 23
      %p93 = por %p91, %p92
      %p94 = scmp.ne.s32.totalorder %s83, %s84
      %p95 = scmp.eq.s32.totalorder %s27, 0
      %p96 = por %p94, %p95
      %p97 = scmp.ne.s32.totalorder %s83, %s84
      %p98 = scmp.eq.s32.totalorder %s28, 23
      %p99 = por %p97, %p98
      %p101 = scmp.ne.s32.totalorder %s84, %s100
      %p102 = scmp.eq.s32.totalorder %s28, 0
      %p103 = por %p101, %p102
      %s104 = ssub.s32 %s29, %s41
      %p105 = scmp.eq.s32.totalorder %s104, 0
      %s107 = sadd.s32 %s106, 1
      %s108 = scalar_select %p105, %s106, %s107
      %p111 = pneg %p105
      %p112 = scmp.eq.s32.totalorder %s22, 23
      %p113 = por %p111, %p112
      %p114 = scmp.ne.s32.totalorder %s106, %s109
      %p115 = scmp.eq.s32.totalorder %s22, 0
      %p116 = por %p114, %p115
      %p117 = scmp.ne.s32.totalorder %s106, %s109
      %p118 = scmp.eq.s32.totalorder %s27, 23
      %p119 = por %p117, %p118
      %p120 = scmp.ne.s32.totalorder %s109, %s110
      %p121 = scmp.eq.s32.totalorder %s27, 0
      %p122 = por %p120, %p121
      %p123 = scmp.ne.s32.totalorder %s109, %s110
      %p124 = scmp.eq.s32.totalorder %s28, 23
      %p125 = por %p123, %p124
      %p127 = scmp.ne.s32.totalorder %s110, %s126
      %p128 = scmp.eq.s32.totalorder %s28, 0
      %p129 = por %p127, %p128
      %p130 = scmp.le.s32.totalorder 1, %s22
      %p131 = scmp.lt.s32.totalorder %s22, 25
      %p132 = pnand %p130, %p131
      %p133 = pneg %p132
      // Predicated region
      $region9: #{tpu_custom_call.1} parent=5 // pred_check
        _
      $region10: #{tpu_custom_call.1} parent=5 // pred_check_branch
        %135 = sbr.rel (%p132) target = $region12
      $region11: #{tpu_custom_call.1} parent=5 // pred_region
        %s136 = ssub.s32 %s22, 1
      $region12: #{tpu_custom_call.1} parent=5 // pred_fallthru
        _
      %p137 = scmp.lt.s32.totalorder %s22, 24
      // Predicated region
      $region13: #{tpu_custom_call.1} parent=5 // pred_check
        %p138 = pneg %p137
      $region14: #{tpu_custom_call.1} parent=5 // pred_check_branch
        %140 = sbr.rel (%p138) target = $region16
      $region15: #{tpu_custom_call.1} parent=5 // pred_region
        // Predicated region
        $region17: #{tpu_custom_call.1} parent=15 // pred_check
          %p141 = pneg %p60
        $region18: #{tpu_custom_call.1} parent=15 // pred_check_branch
          %143 = sbr.rel (%p141) target = $region20
        $region19: #{tpu_custom_call.1} parent=15 // pred_region
          %s144 = sand.u32 %s50, 1
          %s145 = scalar_lea.sflag [#allocation6], %s144
          %s146 = sand.u32 %s50, 1
          %s147 = smul.addr %s146, 8
          %s148 = scalar_lea.vmem [#allocation5], %s147
          %s149 = smul.u32 %s29, 4
          %s150 = sadd.s32 %s149, %s30
          %s151 = sld [smem:[#allocation4 + %s150]]
          %s153 = ssub.s32 128, 128
          %154 = vsyncadd %s145, %s153
          %s155 = smul.addr %s151, 2
          %s156 = smul.addr %s155, 64
          %s157 = scalar_lea.hbm %s1, %s156
          %s159 = sshll.u32 %s148, 4
          %s160 = int_to_ptr.vmem [resolvable:$true] %s159
          %162 = dma.hbm_to_vmem [thread:$0]  %s157, 128, %s160, %s145
        $region20: #{tpu_custom_call.1} parent=15 // pred_fallthru
          _
        // Predicated region
        $region21: #{tpu_custom_call.1} parent=15 // pred_check
          %p163 = pneg %p90
        $region22: #{tpu_custom_call.1} parent=15 // pred_check_branch
          %165 = sbr.rel (%p163) target = $region24
        $region23: #{tpu_custom_call.1} parent=15 // pred_region
          %s166 = sand.u32 %s80, 1
          %s167 = scalar_lea.sflag [#allocation9], %s166
          %s168 = sand.u32 %s80, 1
          %s169 = smul.addr %s168, 256
          %s170 = scalar_lea.vmem [#allocation8], %s169
          %s171 = smul.u32 %s29, 4
          %s172 = sadd.s32 %s171, %s30
          %s174 = ssub.s32 4096, 4096
          %175 = vsyncadd %s167, %s174
          %s176 = smul.addr %s172, 64
          %s177 = smul.addr %s176, 64
          %s178 = scalar_lea.hbm %s2, %s177
          %s179 = sshll.u32 %s170, 4
          %s180 = int_to_ptr.vmem [resolvable:$true] %s179
          %185 = dma.hbm_to_vmem [thread:$0]  %s178, 4096, %s180, %s167, 128, 128, 8
        $region24: #{tpu_custom_call.1} parent=15 // pred_fallthru
          _
      $region16: #{tpu_custom_call.1} parent=5 // pred_fallthru
        _
      %p186 = scmp.le.s32.totalorder 1, %s22
      %p187 = scmp.lt.s32.totalorder %s22, 25
      %p188 = pnand %p186, %p187
      %p189 = pneg %p188
      // Predicated region
      $region25: #{tpu_custom_call.1} parent=5 // pred_check
        _
      $region26: #{tpu_custom_call.1} parent=5 // pred_check_branch
        %191 = sbr.rel (%p188) target = $region28
      $region27: #{tpu_custom_call.1} parent=5 // pred_region
        %s192 = ssub.s32 %s22, 1
        %s193 = sand.u32 %s53, 1
        %s194 = scalar_lea.sflag [#allocation6], %s193
        %s195 = sand.u32 %s53, 1
        %s196 = smul.addr %s195, 8
        %s197 = scalar_lea.vmem [#allocation5], %s196
        // Predicated region
        $region29: #{tpu_custom_call.1} parent=27 // pred_check
          %p198 = pneg %p66
        $region30: #{tpu_custom_call.1} parent=27 // pred_check_branch
          %200 = sbr.rel (%p198) target = $region32
        $region31: #{tpu_custom_call.1} parent=27 // pred_region
          %201 = dma.done %s194, 128
        $region32: #{tpu_custom_call.1} parent=27 // pred_fallthru
          _
        %s202 = sand.u32 %s83, 1
        %s203 = scalar_lea.sflag [#allocation9], %s202
        %s204 = sand.u32 %s83, 1
        %s205 = smul.addr %s204, 256
        %s206 = scalar_lea.vmem [#allocation8], %s205
        // Predicated region
        $region33: #{tpu_custom_call.1} parent=27 // pred_check
          %p207 = pneg %p96
        $region34: #{tpu_custom_call.1} parent=27 // pred_check_branch
          %209 = sbr.rel (%p207) target = $region36
        $region35: #{tpu_custom_call.1} parent=27 // pred_region
          %210 = dma.done %s203, 4096
        $region36: #{tpu_custom_call.1} parent=27 // pred_fallthru
          _
        %s211 = sand.u32 %s53, 1
        %s212 = scalar_lea.sflag [#allocation6], %s211
        %s213 = sand.u32 %s53, 1
        %s214 = smul.addr %s213, 8
        %s215 = scalar_lea.vmem [#allocation5], %s214
        %p216 = pneg %p66
        %p217 = pneg %p63
        %s218 = sand.u32 %s83, 1
        %s219 = scalar_lea.sflag [#allocation9], %s218
        %s220 = sand.u32 %s83, 1
        %s221 = smul.addr %s220, 256
        %s222 = scalar_lea.vmem [#allocation8], %s221
        %p223 = pneg %p96
        %p224 = pneg %p93
        %p225 = pneg %p122
        %p226 = pneg %p119
        %s227 = sand.u32 %s109, 1
        %s228 = scalar_lea.sflag [#allocation7], %s227
        %s229 = sand.u32 %s109, 1
        %s230 = smul.addr %s229, 16
        %s231 = scalar_lea.vmem [#allocation10], %s230
        %s232 = smul.u32 %s31, 4
        %s233 = sadd.s32 %s232, %s32
        %s234 = sld [smem:[#allocation4 + %s233]]
        %s235 = smul.u32 %s31, 4
        %s236 = sadd.s32 %s235, %s32
        %p237 = scmp.eq.s32.totalorder %s32, 0
        // Predicated region
        $region37: #{tpu_custom_call.1} parent=27 // pred_check
          %p238 = pneg %p237
        $region38: #{tpu_custom_call.1} parent=27 // pred_check_branch
          %240 = sbr.rel (%p238) target = $region40
        $region39: #{tpu_custom_call.1} parent=27 // pred_region
          %241 = vst [vmem:[#allocation2] sm:$0xff] 0.0
          %242 = vst [vmem:[#allocation2 + $0x8] sm:$0xff] 0.0
        $region40: #{tpu_custom_call.1} parent=27 // pred_fallthru
          _
        %v243 = vld [vmem:[#allocation2] sm:$0xff]
        %v244 = vld [vmem:[#allocation2 + $0x8] sm:$0xff]
        %v245 = vld [vmem:[%s197] sm:$0xff]
        %v246 = vld [vmem:[%s206] sm:$0xff]
        %v247 = vld [vmem:[%s206 + $0x8] sm:$0xff]
        %v248 = vld [vmem:[%s206 + $0x10] sm:$0xff]
        %v249 = vld [vmem:[%s206 + $0x18] sm:$0xff]
        %v250 = vld [vmem:[%s206 + $0x20] sm:$0xff]
        %v251 = vld [vmem:[%s206 + $0x28] sm:$0xff]
        %v252 = vld [vmem:[%s206 + $0x30] sm:$0xff]
        %v253 = vld [vmem:[%s206 + $0x38] sm:$0xff]
        %v254 = vld [vmem:[%s206 + $0x40] sm:$0xff]
        %v255 = vld [vmem:[%s206 + $0x48] sm:$0xff]
        %v256 = vld [vmem:[%s206 + $0x50] sm:$0xff]
        %v257 = vld [vmem:[%s206 + $0x58] sm:$0xff]
        %v258 = vld [vmem:[%s206 + $0x60] sm:$0xff]
        %v259 = vld [vmem:[%s206 + $0x68] sm:$0xff]
        %v260 = vld [vmem:[%s206 + $0x70] sm:$0xff]
        %v261 = vld [vmem:[%s206 + $0x78] sm:$0xff]
        %v262 = vld [vmem:[%s206 + $0x80] sm:$0xff]
        %v263 = vld [vmem:[%s206 + $0x88] sm:$0xff]
        %v264 = vld [vmem:[%s206 + $0x90] sm:$0xff]
        %v265 = vld [vmem:[%s206 + $0x98] sm:$0xff]
        %v266 = vld [vmem:[%s206 + $0xa0] sm:$0xff]
        %v267 = vld [vmem:[%s206 + $0xa8] sm:$0xff]
        %v268 = vld [vmem:[%s206 + $0xb0] sm:$0xff]
        %v269 = vld [vmem:[%s206 + $0xb8] sm:$0xff]
        %v270 = vld [vmem:[%s206 + $0xc0] sm:$0xff]
        %v271 = vld [vmem:[%s206 + $0xc8] sm:$0xff]
        %v272 = vld [vmem:[%s206 + $0xd0] sm:$0xff]
        %v273 = vld [vmem:[%s206 + $0xd8] sm:$0xff]
        %v274 = vld [vmem:[%s206 + $0xe0] sm:$0xff]
        %v275 = vld [vmem:[%s206 + $0xe8] sm:$0xff]
        %v276 = vld [vmem:[%s206 + $0xf0] sm:$0xff]
        %v277 = vld [vmem:[%s206 + $0xf8] sm:$0xff]
        %v279 = vunpack.c.l.b16 %v245
        %v280 = vunpack.c.h.b16 %v245
        %v281 = vpack.c.b16 %v279, %v279
        %v282 = vpack.c.b16 %v280, %v280
        %v317 = vunpack.c.l.b16 %v246
        %v318 = vunpack.c.h.b16 %v246
        %v319 = vunpack.c.l.b16 %v247
        %v320 = vunpack.c.h.b16 %v247
        %v321 = vunpack.c.l.b16 %v248
        %v322 = vunpack.c.h.b16 %v248
        %v323 = vunpack.c.l.b16 %v249
        %v324 = vunpack.c.h.b16 %v249
        %v325 = vunpack.c.l.b16 %v250
        %v326 = vunpack.c.h.b16 %v250
        %v327 = vunpack.c.l.b16 %v251
        %v328 = vunpack.c.h.b16 %v251
        %v329 = vunpack.c.l.b16 %v252
        %v330 = vunpack.c.h.b16 %v252
        %v331 = vunpack.c.l.b16 %v253
        %v332 = vunpack.c.h.b16 %v253
        %v333 = vunpack.c.l.b16 %v254
        %v334 = vunpack.c.h.b16 %v254
        %v335 = vunpack.c.l.b16 %v255
        %v336 = vunpack.c.h.b16 %v255
        %v337 = vunpack.c.l.b16 %v256
        %v338 = vunpack.c.h.b16 %v256
        %v339 = vunpack.c.l.b16 %v257
        %v340 = vunpack.c.h.b16 %v257
        %v341 = vunpack.c.l.b16 %v258
        %v342 = vunpack.c.h.b16 %v258
        %v343 = vunpack.c.l.b16 %v259
        %v344 = vunpack.c.h.b16 %v259
        %v345 = vunpack.c.l.b16 %v260
        %v346 = vunpack.c.h.b16 %v260
        %v347 = vunpack.c.l.b16 %v261
        %v348 = vunpack.c.h.b16 %v261
        %v349 = vunpack.c.l.b16 %v262
        %v350 = vunpack.c.h.b16 %v262
        %v351 = vunpack.c.l.b16 %v263
        %v352 = vunpack.c.h.b16 %v263
        %v353 = vunpack.c.l.b16 %v264
        %v354 = vunpack.c.h.b16 %v264
        %v355 = vunpack.c.l.b16 %v265
        %v356 = vunpack.c.h.b16 %v265
        %v357 = vunpack.c.l.b16 %v266
        %v358 = vunpack.c.h.b16 %v266
        %v359 = vunpack.c.l.b16 %v267
        %v360 = vunpack.c.h.b16 %v267
        %v361 = vunpack.c.l.b16 %v268
        %v362 = vunpack.c.h.b16 %v268
        %v363 = vunpack.c.l.b16 %v269
        %v364 = vunpack.c.h.b16 %v269
        %v365 = vunpack.c.l.b16 %v270
        %v366 = vunpack.c.h.b16 %v270
        %v367 = vunpack.c.l.b16 %v271
        %v368 = vunpack.c.h.b16 %v271
        %v369 = vunpack.c.l.b16 %v272
        %v370 = vunpack.c.h.b16 %v272
        %v371 = vunpack.c.l.b16 %v273
        %v372 = vunpack.c.h.b16 %v273
        %v373 = vunpack.c.l.b16 %v274
        %v374 = vunpack.c.h.b16 %v274
        %v375 = vunpack.c.l.b16 %v275
        %v376 = vunpack.c.h.b16 %v275
        %v377 = vunpack.c.l.b16 %v276
        %v378 = vunpack.c.h.b16 %v276
        %v379 = vunpack.c.l.b16 %v277
        %v380 = vunpack.c.h.b16 %v277
        %v381 = vpack.c.b16 %v319, %v317
        %v382 = vpack.c.b16 %v320, %v318
        %v383 = vpack.c.b16 %v323, %v321
        %v384 = vpack.c.b16 %v324, %v322
        %v385 = vpack.c.b16 %v327, %v325
        %v386 = vpack.c.b16 %v328, %v326
        %v387 = vpack.c.b16 %v331, %v329
        %v388 = vpack.c.b16 %v332, %v330
        %v389 = vpack.c.b16 %v335, %v333
        %v390 = vpack.c.b16 %v336, %v334
        %v391 = vpack.c.b16 %v339, %v337
        %v392 = vpack.c.b16 %v340, %v338
        %v393 = vpack.c.b16 %v343, %v341
        %v394 = vpack.c.b16 %v344, %v342
        %v395 = vpack.c.b16 %v347, %v345
        %v396 = vpack.c.b16 %v348, %v346
        %v397 = vpack.c.b16 %v351, %v349
        %v398 = vpack.c.b16 %v352, %v350
        %v399 = vpack.c.b16 %v355, %v353
        %v400 = vpack.c.b16 %v356, %v354
        %v401 = vpack.c.b16 %v359, %v357
        %v402 = vpack.c.b16 %v360, %v358
        %v403 = vpack.c.b16 %v363, %v361
        %v404 = vpack.c.b16 %v364, %v362
        %v405 = vpack.c.b16 %v367, %v365
        %v406 = vpack.c.b16 %v368, %v366
        %v407 = vpack.c.b16 %v371, %v369
        %v408 = vpack.c.b16 %v372, %v370
        %v409 = vpack.c.b16 %v375, %v373
        %v410 = vpack.c.b16 %v376, %v374
        %v411 = vpack.c.b16 %v379, %v377
        %v412 = vpack.c.b16 %v380, %v378
        %445 = vmatprep.subr.bf16.mxu0 %v382
        %446 = vmatpush1.bf16.msra.mxu0 %v381
        %447 = vmatprep.subr.bf16.mxu0 %v384
        %448 = vmatpush1.bf16.msra.mxu0 %v383
        %449 = vmatprep.subr.bf16.mxu0 %v386
        %450 = vmatpush1.bf16.msra.mxu0 %v385
        %451 = vmatprep.subr.bf16.mxu0 %v388
        %452 = vmatpush1.bf16.msra.mxu0 %v387
        %453 = vmatprep.subr.bf16.mxu0 %v390
        %454 = vmatpush1.bf16.msra.mxu0 %v389
        %455 = vmatprep.subr.bf16.mxu0 %v392
        %456 = vmatpush1.bf16.msra.mxu0 %v391
        %457 = vmatprep.subr.bf16.mxu0 %v394
        %458 = vmatpush1.bf16.msra.mxu0 %v393
        %459 = vmatprep.subr.bf16.mxu0 %v396
        %460 = vmatpush1.bf16.msra.mxu0 %v395
        %461 = vmatprep.subr.bf16.mxu0 %v398
        %462 = vmatpush1.bf16.msra.mxu0 %v397
        %463 = vmatprep.subr.bf16.mxu0 %v400
        %464 = vmatpush1.bf16.msra.mxu0 %v399
        %465 = vmatprep.subr.bf16.mxu0 %v402
        %466 = vmatpush1.bf16.msra.mxu0 %v401
        %467 = vmatprep.subr.bf16.mxu0 %v404
        %468 = vmatpush1.bf16.msra.mxu0 %v403
        %469 = vmatprep.subr.bf16.mxu0 %v406
        %470 = vmatpush1.bf16.msra.mxu0 %v405
        %471 = vmatprep.subr.bf16.mxu0 %v408
        %472 = vmatpush1.bf16.msra.mxu0 %v407
        %473 = vmatprep.subr.bf16.mxu0 %v410
        %474 = vmatpush1.bf16.msra.mxu0 %v409
        %475 = vmatprep.subr.bf16.mxu0 %v412
        %476 = vmatpush1.bf16.msra.mxu0 %v411
        %477 = vmatprep.mubr.bf16.mxu0 %v282
        %478 = vmatmul.mubr.bf16.gmra.mrb[0].mxu0 %v281
        %v479 = vpop.f32.mrb[0].mxu0
        %v480 = vadd.f32 0.0, %v479
        %v481 = vpop.f32.mrb[0].mxu0
        %v482 = vadd.f32 0.0, %v481
        %v483 = vpop.f32.mrb[0].mxu0
        %v484 = vpop.f32.mrb[0].mxu0
        %485 = vdwg.mxu0
        %v486 = vadd.f32 %v243, %v480
        %v487 = vadd.f32 %v244, %v482
        %488 = vst [vmem:[#allocation2] sm:$0xff] %v486
        %489 = vst [vmem:[#allocation2 + $0x8] sm:$0xff] %v487
        %p490 = scmp.eq.s32.totalorder %s32, 3
        // Predicated region
        $region41: #{tpu_custom_call.1} parent=27 // pred_check
          %p491 = pneg %p490
        $region42: #{tpu_custom_call.1} parent=27 // pred_check_branch
          %493 = sbr.rel (%p491) target = $region44
        $region43: #{tpu_custom_call.1} parent=27 // pred_region
          %v494 = vld [vmem:[#allocation2] sm:$0xff]
          %v495 = vld [vmem:[#allocation2 + $0x8] sm:$0xff]
          %496 = vst [vmem:[%s231] sm:$0xff] %v494
          %497 = vst [vmem:[%s231 + $0x8] sm:$0xff] %v495
        $region44: #{tpu_custom_call.1} parent=27 // pred_fallthru
          _
        %s498 = sand.u32 %s109, 1
        %s499 = scalar_lea.sflag [#allocation7], %s498
        %s500 = sand.u32 %s109, 1
        %s501 = smul.addr %s500, 16
        %s502 = scalar_lea.vmem [#allocation10], %s501
        // Predicated region
        $region45: #{tpu_custom_call.1} parent=27 // pred_check
          %p503 = pneg %p119
        $region46: #{tpu_custom_call.1} parent=27 // pred_check_branch
          %505 = sbr.rel (%p503) target = $region48
        $region47: #{tpu_custom_call.1} parent=27 // pred_region
          %s507 = ssub.s32 256, 256
          %508 = vsyncadd %s499, %s507
          %s509 = smul.addr %s31, 2
          %s510 = smul.addr %s509, 128
          %s511 = scalar_lea.hbm %s3, %s510
          %s513 = sshll.u32 %s502, 4
          %s514 = int_to_ptr.vmem [resolvable:$true] %s513
          %516 = dma.vmem_to_hbm [thread:$0]  %s514, 256, %s511, %s499
        $region48: #{tpu_custom_call.1} parent=27 // pred_fallthru
          _
      $region28: #{tpu_custom_call.1} parent=5 // pred_fallthru
        _
      %p517 = scmp.le.s32.totalorder 2, %s22
      // Predicated region
      $region49: #{tpu_custom_call.1} parent=5 // pred_check
        %p518 = pneg %p517
      $region50: #{tpu_custom_call.1} parent=5 // pred_check_branch
        %520 = sbr.rel (%p518) target = $region52
      $region51: #{tpu_custom_call.1} parent=5 // pred_region
        %s521 = ssub.s32 %s22, 2
        // Predicated region
        $region53: #{tpu_custom_call.1} parent=51 // pred_check
          %p522 = pneg %p125
        $region54: #{tpu_custom_call.1} parent=51 // pred_check_branch
          %524 = sbr.rel (%p522) target = $region56
        $region55: #{tpu_custom_call.1} parent=51 // pred_region
          %s525 = sand.u32 %s110, 1
          %s526 = scalar_lea.sflag [#allocation7], %s525
          %s527 = sand.u32 %s110, 1
          %s528 = smul.addr %s527, 16
          %s529 = scalar_lea.vmem [#allocation10], %s528
          %530 = dma.done %s526, 256
        $region56: #{tpu_custom_call.1} parent=51 // pred_fallthru
          _
      $region52: #{tpu_custom_call.1} parent=5 // pred_fallthru
        _
    $region6: #{tpu_custom_call.1} parent=1 // loop_footer
      %s26 = sadd.s32 1, %s22
    $region7: #{tpu_custom_call.1} parent=1 // loop_footer_branch
      %21 = sbr.rel target = $region3
    $region8: #{tpu_custom_call.1} parent=1 // loop_exit
      _
    %531 = vsyncpa [#allocation6], 1
    %s532 = scalar_lea.sflag [#allocation6], 1
    %533 = vsyncpa %s532, 1
    %534 = vsyncpa [#allocation9], 1
    %s535 = scalar_lea.sflag [#allocation9], 1
    %536 = vsyncpa %s535, 1
    %537 = vsyncpa [#allocation7], 1
    %s538 = scalar_lea.sflag [#allocation7], 1
    %539 = vsyncpa %s538, 1

</llo_original>
